<compile_context>
chip_gen: v5e
topology: v5e:2x2
jax: 0.10.0
libtpu: 0.0.40
codegen_flags: <defaults>
</compile_context>

<pallas_src>
import numpy as np
import jax
import jax.numpy as jnp
from jax.experimental import pallas as pl
from jax.experimental.pallas import tpu as pltpu


def _torch_linspace_long(start, end, steps):
    """Reproduce torch.linspace(start, end, steps).long() (float32 math, ATen's
    symmetric evaluation, truncation toward zero for the non-negative values
    used here)."""
    if steps <= 0:
        return np.zeros((0,), dtype=np.int64)
    if steps == 1:
        return np.array([int(np.float32(start))], dtype=np.int64)
    start_f = np.float32(start)
    end_f = np.float32(end)
    step_f = (end_f - start_f) / np.float32(steps - 1)
    i = np.arange(steps, dtype=np.int64)
    lo = start_f + step_f * i.astype(np.float32)           # first half
    hi = end_f - step_f * (steps - 1 - i).astype(np.float32)  # second half
    vals = np.where(i < steps // 2, lo, hi).astype(np.float32)
    return vals.astype(np.int64)


def _make_hbm_gather_kernel(slow_idx, max_in_flight=None):
    """Kernel factory: copies frames[:, slow_idx[i]] -> out[:, i] with direct
    HBM->HBM DMAs.  `slow_idx` is a compile-time-constant tuple, so all slicing
    is static and no scalar prefetch / index_map plumbing is needed."""
    n_copies = len(slow_idx)
    # Default: keep ALL copies in flight (HBM->HBM copies have no VMEM backing
    # buffer, so the only cost of deeper concurrency is one DMA sem per slot).
    k = n_copies if max_in_flight is None else max(1, min(max_in_flight, n_copies))

    def kernel(x_hbm, o_hbm, sems):
        copies = [
            pltpu.make_async_copy(
                x_hbm.at[:, t:t + 1],   # (C, 1, H*W) source frame in HBM
                o_hbm.at[:, i:i + 1],   # (C, 1, H*W) destination slot in HBM
                sems.at[i % k],
            )
            for i, t in enumerate(slow_idx)
        ]
        # Issue loop.  With k == n_copies (default) this degenerates to
        # "start everything, then wait on everything" — no issue is ever gated
        # on a completion.  A semaphore slot is only reused (k < n_copies) after
        # the copy that previously held it has been waited on.
        # Note: typical SlowFast clips have n_slow <= 16, so the fully unrolled
        # form stays tiny; a rolled fori_loop only pays off for n_slow >> 64.
        for i in range(n_copies):
            if i >= k:
                copies[i - k].wait()
            copies[i].start()
        for i in range(max(0, n_copies - k), n_copies):
            copies[i].wait()

    return kernel, k


def pack_pathway(frames: jax.Array, alpha: int = 4, max_in_flight=None):
    """Pallas equivalent of PackPathway.forward: returns [slow, fast]."""
    C, T, H, W = frames.shape
    n_slow = T // alpha
    fast_pathway = frames  # identity pathway; returned by reference, no compute

    if n_slow == 0:
        # T < alpha: torch.linspace(..., 0).long() is empty -> empty slow clip.
        return [jnp.zeros((C, 0, H, W), frames.dtype), fast_pathway]

    idx = _torch_linspace_long(0.0, float(T - 1), n_slow)
    slow_idx = tuple(int(min(max(v, 0), T - 1)) for v in idx)  # defensive clamp

    hw = H * W
    x = frames.reshape(C, T, hw)  # free reshape: contiguous H*W rows per frame

    kernel, k = _make_hbm_gather_kernel(slow_idx, max_in_flight)

    slow = pl.pallas_call(
        kernel,
        out_shape=jax.ShapeDtypeStruct((C, n_slow, hw), frames.dtype),
        in_specs=[pl.BlockSpec(memory_space=pltpu.HBM)],   # raw HBM ref, no auto-DMA
        out_specs=pl.BlockSpec(memory_space=pltpu.HBM),    # written only via DMA
        scratch_shapes=[pltpu.SemaphoreType.DMA((k,))],
        compiler_params=pltpu.CompilerParams(has_side_effects=True),
    )(x)

    return [slow.reshape(C, n_slow, H, W), fast_pathway]


if __name__ == "__main__":
    key = jax.random.PRNGKey(0)
    C, T, H, W = 3, 16, 16, 16  # small clip: 3 channels, 16 frames, 16x16
    frames = jax.random.normal(key, (C, T, H, W), dtype=jnp.float32)

    slow, fast = pack_pathway(frames, alpha=4)
    jax.block_until_ready(slow)
    jax.block_until_ready(fast)

    # Independent reference check (same semantics as the PyTorch module).
    n_slow = T // 4
    ref_idx = np.linspace(0.0, T - 1, n_slow, dtype=np.float32).astype(np.int64)
    frames_np = np.asarray(frames)
    np.testing.assert_array_equal(np.asarray(slow), frames_np[:, ref_idx, :, :])
    np.testing.assert_array_equal(np.asarray(fast), frames_np)
    assert slow.shape == (C, n_slow, H, W)

    # Degenerate case: T < alpha -> empty slow pathway (no kernel launch).
    slow_e, fast_e = pack_pathway(frames[:, :3], alpha=4)
    assert slow_e.shape == (C, 0, H, W) and fast_e.shape == (C, 3, H, W)

    print("KERNEL_OK")
</pallas_src>

<mosaic_0001>
module attributes {stable_mosaic.version = 11 : i64} {
  func.func @kernel(%arg0: memref<3x16x256xf32, #tpu.memory_space<hbm>>, %arg1: memref<3x4x256xf32, #tpu.memory_space<hbm>>, %arg2: memref<4x!tpu.dma_semaphore, #tpu.memory_space<semaphore_mem>>) attributes {dimension_semantics = [], scalar_prefetch = 0 : i64, scratch_operands = 1 : i64, tpu.core_type = #tpu.core_type<tc>} {
    %c0_i32 = arith.constant 0 : i32
    %c0_i32_0 = arith.constant 0 : i32
    %c0_i32_1 = arith.constant 0 : i32
    %c0_i32_2 = arith.constant 0 : i32
    %0 = tpu.memref_slice %arg0[%c0_i32_0, %c0_i32_1, %c0_i32_2] : memref<3x16x256xf32, #tpu.memory_space<hbm>> -> memref<3x1x256xf32, #tpu.memory_space<hbm>>
    %c0_i32_3 = arith.constant 0 : i32
    %c0_i32_4 = arith.constant 0 : i32
    %c0_i32_5 = arith.constant 0 : i32
    %1 = tpu.memref_slice %arg1[%c0_i32_3, %c0_i32_4, %c0_i32_5] : memref<3x4x256xf32, #tpu.memory_space<hbm>> -> memref<3x1x256xf32, #tpu.memory_space<hbm>>
    %2 = tpu.memref_slice %arg2[%c0_i32] : memref<4x!tpu.dma_semaphore, #tpu.memory_space<semaphore_mem>> -> memref<1x!tpu.dma_semaphore, #tpu.memory_space<semaphore_mem>>
    %3 = tpu.memref_squeeze %2 : memref<1x!tpu.dma_semaphore, #tpu.memory_space<semaphore_mem>> -> memref<!tpu.dma_semaphore, #tpu.memory_space<semaphore_mem>>
    tpu.enqueue_dma source(%0 : memref<3x1x256xf32, #tpu.memory_space<hbm>>) target(%1 : memref<3x1x256xf32, #tpu.memory_space<hbm>>) target_semaphore(%3 : memref<!tpu.dma_semaphore, #tpu.memory_space<semaphore_mem>>)
    %c1_i32 = arith.constant 1 : i32
    %c0_i32_6 = arith.constant 0 : i32
    %c5_i32 = arith.constant 5 : i32
    %c0_i32_7 = arith.constant 0 : i32
    %4 = tpu.memref_slice %arg0[%c0_i32_6, %c5_i32, %c0_i32_7] : memref<3x16x256xf32, #tpu.memory_space<hbm>> -> memref<3x1x256xf32, #tpu.memory_space<hbm>>
    %c0_i32_8 = arith.constant 0 : i32
    %c1_i32_9 = arith.constant 1 : i32
    %c0_i32_10 = arith.constant 0 : i32
    %5 = tpu.memref_slice %arg1[%c0_i32_8, %c1_i32_9, %c0_i32_10] : memref<3x4x256xf32, #tpu.memory_space<hbm>> -> memref<3x1x256xf32, #tpu.memory_space<hbm>>
    %6 = tpu.memref_slice %arg2[%c1_i32] : memref<4x!tpu.dma_semaphore, #tpu.memory_space<semaphore_mem>> -> memref<1x!tpu.dma_semaphore, #tpu.memory_space<semaphore_mem>>
    %7 = tpu.memref_squeeze %6 : memref<1x!tpu.dma_semaphore, #tpu.memory_space<semaphore_mem>> -> memref<!tpu.dma_semaphore, #tpu.memory_space<semaphore_mem>>
    tpu.enqueue_dma source(%4 : memref<3x1x256xf32, #tpu.memory_space<hbm>>) target(%5 : memref<3x1x256xf32, #tpu.memory_space<hbm>>) target_semaphore(%7 : memref<!tpu.dma_semaphore, #tpu.memory_space<semaphore_mem>>)
    %c2_i32 = arith.constant 2 : i32
    %c0_i32_11 = arith.constant 0 : i32
    %c10_i32 = arith.constant 10 : i32
    %c0_i32_12 = arith.constant 0 : i32
    %8 = tpu.memref_slice %arg0[%c0_i32_11, %c10_i32, %c0_i32_12] : memref<3x16x256xf32, #tpu.memory_space<hbm>> -> memref<3x1x256xf32, #tpu.memory_space<hbm>>
    %c0_i32_13 = arith.constant 0 : i32
    %c2_i32_14 = arith.constant 2 : i32
    %c0_i32_15 = arith.constant 0 : i32
    %9 = tpu.memref_slice %arg1[%c0_i32_13, %c2_i32_14, %c0_i32_15] : memref<3x4x256xf32, #tpu.memory_space<hbm>> -> memref<3x1x256xf32, #tpu.memory_space<hbm>>
    %10 = tpu.memref_slice %arg2[%c2_i32] : memref<4x!tpu.dma_semaphore, #tpu.memory_space<semaphore_mem>> -> memref<1x!tpu.dma_semaphore, #tpu.memory_space<semaphore_mem>>
    %11 = tpu.memref_squeeze %10 : memref<1x!tpu.dma_semaphore, #tpu.memory_space<semaphore_mem>> -> memref<!tpu.dma_semaphore, #tpu.memory_space<semaphore_mem>>
    tpu.enqueue_dma source(%8 : memref<3x1x256xf32, #tpu.memory_space<hbm>>) target(%9 : memref<3x1x256xf32, #tpu.memory_space<hbm>>) target_semaphore(%11 : memref<!tpu.dma_semaphore, #tpu.memory_space<semaphore_mem>>)
    %c3_i32 = arith.constant 3 : i32
    %c0_i32_16 = arith.constant 0 : i32
    %c15_i32 = arith.constant 15 : i32
    %c0_i32_17 = arith.constant 0 : i32
    %12 = tpu.memref_slice %arg0[%c0_i32_16, %c15_i32, %c0_i32_17] : memref<3x16x256xf32, #tpu.memory_space<hbm>> -> memref<3x1x256xf32, #tpu.memory_space<hbm>>
    %c0_i32_18 = arith.constant 0 : i32
    %c3_i32_19 = arith.constant 3 : i32
    %c0_i32_20 = arith.constant 0 : i32
    %13 = tpu.memref_slice %arg1[%c0_i32_18, %c3_i32_19, %c0_i32_20] : memref<3x4x256xf32, #tpu.memory_space<hbm>> -> memref<3x1x256xf32, #tpu.memory_space<hbm>>
    %14 = tpu.memref_slice %arg2[%c3_i32] : memref<4x!tpu.dma_semaphore, #tpu.memory_space<semaphore_mem>> -> memref<1x!tpu.dma_semaphore, #tpu.memory_space<semaphore_mem>>
    %15 = tpu.memref_squeeze %14 : memref<1x!tpu.dma_semaphore, #tpu.memory_space<semaphore_mem>> -> memref<!tpu.dma_semaphore, #tpu.memory_space<semaphore_mem>>
    tpu.enqueue_dma source(%12 : memref<3x1x256xf32, #tpu.memory_space<hbm>>) target(%13 : memref<3x1x256xf32, #tpu.memory_space<hbm>>) target_semaphore(%15 : memref<!tpu.dma_semaphore, #tpu.memory_space<semaphore_mem>>)
    %c0_i32_21 = arith.constant 0 : i32
    %c0_i32_22 = arith.constant 0 : i32
    %c0_i32_23 = arith.constant 0 : i32
    %c0_i32_24 = arith.constant 0 : i32
    %16 = tpu.memref_slice %arg0[%c0_i32_22, %c0_i32_23, %c0_i32_24] : memref<3x16x256xf32, #tpu.memory_space<hbm>> -> memref<3x1x256xf32, #tpu.memory_space<hbm>>
    %c0_i32_25 = arith.constant 0 : i32
    %c0_i32_26 = arith.constant 0 : i32
    %c0_i32_27 = arith.constant 0 : i32
    %17 = tpu.memref_slice %arg1[%c0_i32_25, %c0_i32_26, %c0_i32_27] : memref<3x4x256xf32, #tpu.memory_space<hbm>> -> memref<3x1x256xf32, #tpu.memory_space<hbm>>
    %18 = tpu.memref_slice %arg2[%c0_i32_21] : memref<4x!tpu.dma_semaphore, #tpu.memory_space<semaphore_mem>> -> memref<1x!tpu.dma_semaphore, #tpu.memory_space<semaphore_mem>>
    %19 = tpu.memref_squeeze %18 : memref<1x!tpu.dma_semaphore, #tpu.memory_space<semaphore_mem>> -> memref<!tpu.dma_semaphore, #tpu.memory_space<semaphore_mem>>
    tpu.wait_dma2 semaphore(%19 : memref<!tpu.dma_semaphore, #tpu.memory_space<semaphore_mem>>) src(%16 : memref<3x1x256xf32, #tpu.memory_space<hbm>>) dst(%17 : memref<3x1x256xf32, #tpu.memory_space<hbm>>)
    %c1_i32_28 = arith.constant 1 : i32
    %c0_i32_29 = arith.constant 0 : i32
    %c5_i32_30 = arith.constant 5 : i32
    %c0_i32_31 = arith.constant 0 : i32
    %20 = tpu.memref_slice %arg0[%c0_i32_29, %c5_i32_30, %c0_i32_31] : memref<3x16x256xf32, #tpu.memory_space<hbm>> -> memref<3x1x256xf32, #tpu.memory_space<hbm>>
    %c0_i32_32 = arith.constant 0 : i32
    %c1_i32_33 = arith.constant 1 : i32
    %c0_i32_34 = arith.constant 0 : i32
    %21 = tpu.memref_slice %arg1[%c0_i32_32, %c1_i32_33, %c0_i32_34] : memref<3x4x256xf32, #tpu.memory_space<hbm>> -> memref<3x1x256xf32, #tpu.memory_space<hbm>>
    %22 = tpu.memref_slice %arg2[%c1_i32_28] : memref<4x!tpu.dma_semaphore, #tpu.memory_space<semaphore_mem>> -> memref<1x!tpu.dma_semaphore, #tpu.memory_space<semaphore_mem>>
    %23 = tpu.memref_squeeze %22 : memref<1x!tpu.dma_semaphore, #tpu.memory_space<semaphore_mem>> -> memref<!tpu.dma_semaphore, #tpu.memory_space<semaphore_mem>>
    tpu.wait_dma2 semaphore(%23 : memref<!tpu.dma_semaphore, #tpu.memory_space<semaphore_mem>>) src(%20 : memref<3x1x256xf32, #tpu.memory_space<hbm>>) dst(%21 : memref<3x1x256xf32, #tpu.memory_space<hbm>>)
    %c2_i32_35 = arith.constant 2 : i32
    %c0_i32_36 = arith.constant 0 : i32
    %c10_i32_37 = arith.constant 10 : i32
    %c0_i32_38 = arith.constant 0 : i32
    %24 = tpu.memref_slice %arg0[%c0_i32_36, %c10_i32_37, %c0_i32_38] : memref<3x16x256xf32, #tpu.memory_space<hbm>> -> memref<3x1x256xf32, #tpu.memory_space<hbm>>
    %c0_i32_39 = arith.constant 0 : i32
    %c2_i32_40 = arith.constant 2 : i32
    %c0_i32_41 = arith.constant 0 : i32
    %25 = tpu.memref_slice %arg1[%c0_i32_39, %c2_i32_40, %c0_i32_41] : memref<3x4x256xf32, #tpu.memory_space<hbm>> -> memref<3x1x256xf32, #tpu.memory_space<hbm>>
    %26 = tpu.memref_slice %arg2[%c2_i32_35] : memref<4x!tpu.dma_semaphore, #tpu.memory_space<semaphore_mem>> -> memref<1x!tpu.dma_semaphore, #tpu.memory_space<semaphore_mem>>
    %27 = tpu.memref_squeeze %26 : memref<1x!tpu.dma_semaphore, #tpu.memory_space<semaphore_mem>> -> memref<!tpu.dma_semaphore, #tpu.memory_space<semaphore_mem>>
    tpu.wait_dma2 semaphore(%27 : memref<!tpu.dma_semaphore, #tpu.memory_space<semaphore_mem>>) src(%24 : memref<3x1x256xf32, #tpu.memory_space<hbm>>) dst(%25 : memref<3x1x256xf32, #tpu.memory_space<hbm>>)
    %c3_i32_42 = arith.constant 3 : i32
    %c0_i32_43 = arith.constant 0 : i32
    %c15_i32_44 = arith.constant 15 : i32
    %c0_i32_45 = arith.constant 0 : i32
    %28 = tpu.memref_slice %arg0[%c0_i32_43, %c15_i32_44, %c0_i32_45] : memref<3x16x256xf32, #tpu.memory_space<hbm>> -> memref<3x1x256xf32, #tpu.memory_space<hbm>>
    %c0_i32_46 = arith.constant 0 : i32
    %c3_i32_47 = arith.constant 3 : i32
    %c0_i32_48 = arith.constant 0 : i32
    %29 = tpu.memref_slice %arg1[%c0_i32_46, %c3_i32_47, %c0_i32_48] : memref<3x4x256xf32, #tpu.memory_space<hbm>> -> memref<3x1x256xf32, #tpu.memory_space<hbm>>
    %30 = tpu.memref_slice %arg2[%c3_i32_42] : memref<4x!tpu.dma_semaphore, #tpu.memory_space<semaphore_mem>> -> memref<1x!tpu.dma_semaphore, #tpu.memory_space<semaphore_mem>>
    %31 = tpu.memref_squeeze %30 : memref<1x!tpu.dma_semaphore, #tpu.memory_space<semaphore_mem>> -> memref<!tpu.dma_semaphore, #tpu.memory_space<semaphore_mem>>
    tpu.wait_dma2 semaphore(%31 : memref<!tpu.dma_semaphore, #tpu.memory_space<semaphore_mem>>) src(%28 : memref<3x1x256xf32, #tpu.memory_space<hbm>>) dst(%29 : memref<3x1x256xf32, #tpu.memory_space<hbm>>)
    return
  }
}

</mosaic_0001>

<llo_original>
// kernel: tpu_custom_call.1
$region0: #{tpu_custom_call.1}
  #allocation0 [shape = 'u32[]', space=smem, size = 0x4, offset = 0x4, fixed_abs, tag = 'smem constant byte address 0x4 - core index']
  #allocation1 [shape = 'u32[72,128]{1,0:T(1,128)}', space=vmem, size = 0x9000, scoped, tag = 'internal scratch']
  #allocation2 [shape = 's32[4]{0}', space=sflag, size = 0x10, scoped, tag = 'scratch operand']
  #allocation3 [shape = 's32[]', space=sflag, size = 0x4, offset = 0, fixed_abs, tag = 'sflag constant byte address 0x0 - dummy sync flag']
  #allocation5 [shape = 's32[]', space=sflag, size = 0x4, offset = 0, fixed_abs, tag = 'sflag constant byte address 0x0 - dummy sync flag']
  #allocation7 [shape = 's32[]', space=sflag, size = 0x4, offset = 0, fixed_abs, tag = 'sflag constant byte address 0x0 - dummy sync flag']
  #allocation9 [shape = 's32[]', space=sflag, size = 0x4, offset = 0, fixed_abs, tag = 'sflag constant byte address 0x0 - dummy sync flag']
  %s0 = inlined_call_operand.hbm [shape: f32[3,16,256], index: 0, kind: input, shape index: {}]
  %s1 = inlined_call_operand.hbm [shape: f32[3,4,256], index: 1, kind: output, shape index: {}]
  %s2 = sld [smem:[#allocation0]]
  $region2: #{tpu_custom_call.1} parent=0
    _
  %s4 = ssub.s32 1, %s2
  %s5 = scalar_select 0, %s4, %s2
  $region1: #{tpu_custom_call.1} parent=0
    #allocation4 [shape = 'u32[6]{0}', space=smem, size = 0x18, scoped, tag = 'DMA stride descriptor']
    #allocation6 [shape = 'u32[6]{0}', space=smem, size = 0x18, scoped, tag = 'DMA stride descriptor']
    #allocation8 [shape = 'u32[6]{0}', space=smem, size = 0x18, scoped, tag = 'DMA stride descriptor']
    #allocation10 [shape = 'u32[6]{0}', space=smem, size = 0x18, scoped, tag = 'DMA stride descriptor']
    %s7 = sshll.u32 1, 14
    %s8 = sxor.u32 4294967295, %s7
    %s10 = sshll.u32 %s0, 4
    %s11 = int_to_ptr.hbm [resolvable:$true] %s10
    %s12 = sshll.u32 %s1, 4
    %s13 = int_to_ptr.hbm [resolvable:$true] %s12
    %19 = sst [smem:[#allocation4]] 512
    %s20 = scalar_lea.smem [#allocation4], 1
    %21 = sst [smem:[%s20]] 128
    %s22 = scalar_lea.smem [#allocation4], 2
    %23 = sst [smem:[%s22]] 2
    %s24 = scalar_lea.smem [#allocation4], 3
    %25 = sst [smem:[%s24]] 128
    %s26 = scalar_lea.smem [#allocation4], 4
    %27 = sst [smem:[%s26]] 64
    %s28 = scalar_lea.smem [#allocation4], 5
    %29 = sst [smem:[%s28]] 1
    %31 = dma.general %s11, 96, %s13, [#allocation2], [#allocation3], [#allocation4], 0, 0
    %s32 = scalar_lea.hbm %s0, 5
    %s33 = scalar_lea.hbm %s1, 1
    %s34 = scalar_lea.sflag [#allocation2], 1
    %s36 = sshll.u32 1, 14
    %s37 = sxor.u32 4294967295, %s36
    %s39 = sshll.u32 %s32, 4
    %s40 = int_to_ptr.hbm [resolvable:$true] %s39
    %s41 = sshll.u32 %s33, 4
    %s42 = int_to_ptr.hbm [resolvable:$true] %s41
    %48 = sst [smem:[#allocation6]] 512
    %s49 = scalar_lea.smem [#allocation6], 1
    %50 = sst [smem:[%s49]] 128
    %s51 = scalar_lea.smem [#allocation6], 2
    %52 = sst [smem:[%s51]] 2
    %s53 = scalar_lea.smem [#allocation6], 3
    %54 = sst [smem:[%s53]] 128
    %s55 = scalar_lea.smem [#allocation6], 4
    %56 = sst [smem:[%s55]] 64
    %s57 = scalar_lea.smem [#allocation6], 5
    %58 = sst [smem:[%s57]] 1
    %60 = dma.general %s40, 96, %s42, %s34, [#allocation5], [#allocation6], 0, 0
    %s61 = scalar_lea.hbm %s0, 18
    %s62 = scalar_lea.hbm %s1, 2
    %s63 = scalar_lea.sflag [#allocation2], 2
    %s65 = sshll.u32 1, 14
    %s66 = sxor.u32 4294967295, %s65
    %s68 = sshll.u32 %s61, 4
    %s69 = int_to_ptr.hbm [resolvable:$true] %s68
    %s70 = sshll.u32 %s62, 4
    %s71 = int_to_ptr.hbm [resolvable:$true] %s70
    %77 = sst [smem:[#allocation8]] 512
    %s78 = scalar_lea.smem [#allocation8], 1
    %79 = sst [smem:[%s78]] 128
    %s80 = scalar_lea.smem [#allocation8], 2
    %81 = sst [smem:[%s80]] 2
    %s82 = scalar_lea.smem [#allocation8], 3
    %83 = sst [smem:[%s82]] 128
    %s84 = scalar_lea.smem [#allocation8], 4
    %85 = sst [smem:[%s84]] 64
    %s86 = scalar_lea.smem [#allocation8], 5
    %87 = sst [smem:[%s86]] 1
    %89 = dma.general %s69, 96, %s71, %s63, [#allocation7], [#allocation8], 0, 0
    %s90 = scalar_lea.hbm %s0, 23
    %s91 = scalar_lea.hbm %s1, 3
    %s92 = scalar_lea.sflag [#allocation2], 3
    %s94 = sshll.u32 1, 14
    %s95 = sxor.u32 4294967295, %s94
    %s97 = sshll.u32 %s90, 4
    %s98 = int_to_ptr.hbm [resolvable:$true] %s97
    %s99 = sshll.u32 %s91, 4
    %s100 = int_to_ptr.hbm [resolvable:$true] %s99
    %106 = sst [smem:[#allocation10]] 512
    %s107 = scalar_lea.smem [#allocation10], 1
    %108 = sst [smem:[%s107]] 128
    %s109 = scalar_lea.smem [#allocation10], 2
    %110 = sst [smem:[%s109]] 2
    %s111 = scalar_lea.smem [#allocation10], 3
    %112 = sst [smem:[%s111]] 128
    %s113 = scalar_lea.smem [#allocation10], 4
    %114 = sst [smem:[%s113]] 64
    %s115 = scalar_lea.smem [#allocation10], 5
    %116 = sst [smem:[%s115]] 1
    %118 = dma.general %s98, 96, %s100, %s92, [#allocation9], [#allocation10], 0, 0
    %s119 = smul.u32 3, 1
    %s120 = smul.u32 %s119, 2
    %s121 = sshll.u32 %s120, 4
    %122 = dma.done [#allocation2], %s121
    %s123 = sshll.u32 %s120, 4
    %124 = dma.done %s34, %s123
    %s125 = sshll.u32 %s120, 4
    %126 = dma.done %s63, %s125
    %s127 = sshll.u32 %s120, 4
    %128 = dma.done %s92, %s127
  %129 = vsyncmov [#allocation2]
  %s130 = vpop.sfrf %129
  %p131 = scmp.eq.s32.totalorder %s130, 0
  %p132 = pneg %p131
  %134 = shalt.err (%p132)
  %s135 = scalar_lea.sflag [#allocation2], 1
  %136 = vsyncmov %s135
  %s137 = vpop.sfrf %136
  %p138 = scmp.eq.s32.totalorder %s137, 0
  %p139 = pneg %p138
  %141 = shalt.err (%p139)
  %s142 = scalar_lea.sflag [#allocation2], 2
  %143 = vsyncmov %s142
  %s144 = vpop.sfrf %143
  %p145 = scmp.eq.s32.totalorder %s144, 0
  %p146 = pneg %p145
  %148 = shalt.err (%p146)
  %s149 = scalar_lea.sflag [#allocation2], 3
  %150 = vsyncmov %s149
  %s151 = vpop.sfrf %150
  %p152 = scmp.eq.s32.totalorder %s151, 0
  %p153 = pneg %p152
  %155 = shalt.err (%p153)

</llo_original>
